<compile_context>
chip_gen: v7x
topology: tpu7x:2x2x1
jax: 0.10.0
libtpu: 0.0.40
codegen_flags: <defaults>
</compile_context>

<pallas_src>
import jax
import jax.numpy as jnp
from jax.experimental import pallas as pl
from jax.experimental.pallas import tpu as pltpu


def _round_up(x, m):
    return ((x + m - 1) // m) * m


def _vmem_capacity_bytes():
    """Physical per-core VMEM (64 MiB on v7x, 128 MiB on v5e/v6e)."""
    try:
        return int(pltpu.get_tpu_info().vmem_capacity_bytes)
    except Exception:
        return 64 * 1024 * 1024   # conservative fallback (v7x-sized)


# ---------------------------------------------------------------------------
# One-time parameter packing (hoisted out of the per-call forward).
# ---------------------------------------------------------------------------
def pack_classifier_params(w1, b1, w2, b2, *, max_k_block=2048):
    """Pack (feat_in->H, H->C) Linear params for the fused kernel.

    w1: [feat_in, hidden]   (transposed vs. torch's [hidden, feat_in])
    b1: [hidden] or [1, hidden]
    w2: [hidden, classes]
    b2: [classes] or [1, classes]
    """
    F, H = w1.shape
    C = w2.shape[1]

    Hp = _round_up(H, 128)                       # lane-dense hidden activation
    Cout = C if C < 128 else _round_up(C, 128)   # pad classes only when large

    if F <= max_k_block:
        TK, Fp = F, F                            # single K step, no F padding
    else:
        TK = max_k_block                         # multiple of 128
        Fp = _round_up(F, TK)

    # Zero padding is exact: padded w1 cols / b1 entries give relu(0)=0 hidden
    # units, and the matching w2 rows are zero, so they contribute nothing.
    w1p = jnp.zeros((Fp, Hp), jnp.bfloat16).at[:F, :H].set(w1.astype(jnp.bfloat16))
    b1p = jnp.zeros((1, Hp), jnp.float32).at[:, :H].set(
        jnp.reshape(b1, (1, H)).astype(jnp.float32))
    w2p = jnp.zeros((Hp, Cout), jnp.bfloat16).at[:H, :C].set(w2.astype(jnp.bfloat16))
    b2p = jnp.zeros((1, Cout), jnp.float32).at[:, :C].set(
        jnp.reshape(b2, (1, C)).astype(jnp.float32))

    meta = dict(F=F, H=H, C=C, Fp=Fp, Hp=Hp, Cout=Cout, TK=TK)
    return (w1p, b1p, w2p, b2p), meta


# ---------------------------------------------------------------------------
# Kernel: grid = (batch tiles, feat_in K tiles)
# ---------------------------------------------------------------------------
def _classifier_kernel(x_ref, w1_ref, b1_ref, w2_ref, b2_ref,
                       preds_ref, preds_con_ref, acc_ref):
    # x:  [TM, TK] f32     w1: [TK, Hp] bf16    b1: [1, Hp] f32
    # w2: [Hp, Cout] bf16  b2: [1, Cout] f32    outs: [TM, Cout] f32
    k = pl.program_id(1)

    @pl.when(k == 0)
    def _():
        acc_ref[...] = jnp.zeros_like(acc_ref)

    # lin1 partial sum: stream f32 x, cast to bf16 on the VPU (hidden under
    # the MXU), bf16 MXU operands with f32 accumulation.
    acc_ref[...] += jnp.dot(x_ref[...].astype(jnp.bfloat16), w1_ref[...],
                            preferred_element_type=jnp.float32)

    @pl.when(k == pl.num_programs(1) - 1)
    def _():
        h = jnp.maximum(acc_ref[...] + b1_ref[...], 0.0)     # bias + ReLU (f32)
        # TODO(synk): dropout (training mode) would be applied to h here.
        p = jnp.dot(h.astype(jnp.bfloat16), w2_ref[...],
                    preferred_element_type=jnp.float32) + b2_ref[...]
        preds_ref[...] = p.astype(preds_ref.dtype)
        preds_con_ref[...] = jnp.maximum(p, 0.0).astype(preds_con_ref.dtype)


# ---------------------------------------------------------------------------
# Forward wrapper
# ---------------------------------------------------------------------------
def classifier_forward(x, packed_params, meta, *, block_m=512):
    """(preds, preds_con) = Classifier(x) with pre-packed params."""
    w1p, b1p, w2p, b2p = packed_params
    F, C = meta["F"], meta["C"]
    Fp, Hp, Cout, TK = meta["Fp"], meta["Hp"], meta["Cout"], meta["TK"]
    B = x.shape[0]
    num_k = Fp // TK

    # ---- generation-aware VMEM budget ---------------------------------
    capacity = _vmem_capacity_bytes()
    vmem_budget = int(0.75 * capacity)
    vmem_limit = min(capacity, 100 * 1024 * 1024)

    def vmem_bytes(tm):
        # Pallas allocates 2 pipeline buffers per operand even when the
        # index_map is constant, so the resident weights are counted twice.
        x_b = 2 * tm * TK * 4                       # streamed f32 x tile
        w1_b = 2 * TK * Hp * 2                      # streamed bf16 w1 K-tile
        resid = 2 * (Hp * Cout * 2 + Hp * 4 + Cout * 4)   # w2 / b1 / b2
        out_b = 2 * 2 * tm * Cout * 4               # two f32 outputs
        acc_b = tm * Hp * 4                         # f32 accumulator scratch
        return x_b + w1_b + resid + out_b + acc_b

    # ---- batch tiling: multiples of 16 (bf16 sublane packing) ----------
    Bq = _round_up(B, 16)
    TM = max(16, (min(block_m, Bq) // 16) * 16)
    # Keep >=2 batch tiles when the batch is big enough so a v7x megacore can
    # split the "parallel" axis across both TensorCores (costs at most one
    # ~0.35us extra grid step on single-TC chips).
    if Bq >= 64:
        TM = min(TM, _round_up(pl.cdiv(Bq, 2), 16))
    while TM > 64 and vmem_bytes(TM) > vmem_budget:
        TM = max(64, ((TM // 2) // 16) * 16)

    grid_m = pl.cdiv(Bq, TM)
    TM = _round_up(pl.cdiv(Bq, grid_m), 16)      # minimize batch padding
    Bp = TM * grid_m

    # ---- pad x only when required (batch alignment / K-tiling of feat_in) --
    if Bp != B or Fp != F:
        x = jnp.pad(x, ((0, Bp - B), (0, Fp - F)))

    cost = pl.CostEstimate(
        flops=2 * Bp * (Fp * Hp + Hp * Cout),
        transcendentals=0,
        bytes_accessed=(Bp * Fp * 4 + Fp * Hp * 2 + Hp * Cout * 2
                        + Hp * 4 + Cout * 4 + 2 * Bp * Cout * 4),
    )

    preds_p, preds_con_p = pl.pallas_call(
        _classifier_kernel,
        out_shape=(jax.ShapeDtypeStruct((Bp, Cout), jnp.float32),
                   jax.ShapeDtypeStruct((Bp, Cout), jnp.float32)),
        grid=(grid_m, num_k),
        in_specs=[
            pl.BlockSpec((TM, TK), lambda i, k: (i, k)),    # x   (f32, streamed)
            pl.BlockSpec((TK, Hp), lambda i, k: (k, 0)),    # w1  (bf16, K-streamed)
            pl.BlockSpec((1, Hp), lambda i, k: (0, 0)),     # b1  (f32, resident)
            pl.BlockSpec((Hp, Cout), lambda i, k: (0, 0)),  # w2  (bf16, resident)
            pl.BlockSpec((1, Cout), lambda i, k: (0, 0)),   # b2  (f32, resident)
        ],
        out_specs=[
            pl.BlockSpec((TM, Cout), lambda i, k: (i, 0)),  # preds
            pl.BlockSpec((TM, Cout), lambda i, k: (i, 0)),  # preds_con
        ],
        scratch_shapes=[pltpu.VMEM((TM, Hp), jnp.float32)],
        compiler_params=pltpu.CompilerParams(
            dimension_semantics=("parallel", "arbitrary"),
            vmem_limit_bytes=vmem_limit,
        ),
        cost_estimate=cost,
    )(x, w1p, b1p, w2p, b2p)

    preds = preds_p[:B, :C]
    preds_con = preds_con_p[:B, :C]
    return preds, preds_con


if __name__ == "__main__":
    # Small shapes consistent with the module's forward: bimodal_emb [B, feat_in]
    batch, feat_in, hidden, num_classes = 8, 32, 64, 16

    key = jax.random.PRNGKey(0)
    kx, k1, k2, k3, k4 = jax.random.split(key, 5)
    lim1 = 1.0 / feat_in ** 0.5
    lim2 = 1.0 / hidden ** 0.5
    x = jax.random.normal(kx, (batch, feat_in), jnp.float32)
    w1 = jax.random.uniform(k1, (feat_in, hidden), jnp.float32, -lim1, lim1)
    b1 = jax.random.uniform(k2, (hidden,), jnp.float32, -lim1, lim1)
    w2 = jax.random.uniform(k3, (hidden, num_classes), jnp.float32, -lim2, lim2)
    b2 = jax.random.uniform(k4, (num_classes,), jnp.float32, -lim2, lim2)

    # One-time packing (hoisted out of the per-call forward).
    packed, meta = pack_classifier_params(w1, b1, w2, b2)

    preds, preds_con = classifier_forward(x, packed, meta)
    jax.block_until_ready((preds, preds_con))

    # Pure-JAX f32 reference (bf16 MXU operands => loosened tolerance).
    h_ref = jnp.maximum(x @ w1 + b1, 0.0)
    preds_ref = h_ref @ w2 + b2
    preds_con_ref = jnp.maximum(preds_ref, 0.0)
    assert preds.shape == (batch, num_classes)
    assert preds_con.shape == (batch, num_classes)
    assert jnp.allclose(preds, preds_ref, atol=5e-2, rtol=5e-2), "preds mismatch"
    assert jnp.allclose(preds_con, preds_con_ref, atol=5e-2, rtol=5e-2), \
        "preds_con mismatch"

    print("KERNEL_OK")
</pallas_src>

<mosaic_0001>
module attributes {stable_mosaic.version = 11 : i64} {
  func.func @_classifier_kernel(%arg0: i32, %arg1: i32, %arg2: memref<16x32xf32, #tpu.memory_space<vmem>>, %arg3: memref<32x128xbf16, #tpu.memory_space<vmem>>, %arg4: memref<1x128xf32, #tpu.memory_space<vmem>>, %arg5: memref<128x16xbf16, #tpu.memory_space<vmem>>, %arg6: memref<1x16xf32, #tpu.memory_space<vmem>>, %arg7: memref<16x16xf32, #tpu.memory_space<vmem>>, %arg8: memref<16x16xf32, #tpu.memory_space<vmem>>, %arg9: memref<16x128xf32, #tpu.memory_space<vmem>>) attributes {dimension_semantics = [#tpu.dimension_semantics<parallel>, #tpu.dimension_semantics<arbitrary>], iteration_bounds = array<i64: 1, 1>, scalar_prefetch = 0 : i64, scratch_operands = 1 : i64, tpu.core_type = #tpu.core_type<tc>, window_params = [{transform_indices = @transform_0, window_bounds = array<i64: 16, 32>}, {transform_indices = @transform_1, window_bounds = array<i64: 32, 128>}, {pipeline_mode = #tpu.pipeline_mode<synchronous>, transform_indices = @transform_2, window_bounds = array<i64: 1, 128>}, {pipeline_mode = #tpu.pipeline_mode<synchronous>, transform_indices = @transform_3, window_bounds = array<i64: 128, 16>}, {pipeline_mode = #tpu.pipeline_mode<synchronous>, transform_indices = @transform_4, window_bounds = array<i64: 1, 16>}, {transform_indices = @transform_5, window_bounds = array<i64: 16, 16>}, {transform_indices = @transform_6, window_bounds = array<i64: 16, 16>}]} {
    %c0_i32 = arith.constant 0 : i32
    %0 = arith.cmpi eq, %arg1, %c0_i32 : i32
    %1 = arith.extui %0 : i1 to i32
    %c0_i32_0 = arith.constant 0 : i32
    %2 = arith.cmpi ne, %1, %c0_i32_0 : i32
    scf.if %2 {
      %cst_10 = arith.constant 0.000000e+00 : f32
      %13 = vector.broadcast %cst_10 : f32 to vector<16x128xf32>
      %c0_11 = arith.constant 0 : index
      %c0_12 = arith.constant 0 : index
      %14 = vector.load %arg9[%c0_11, %c0_12] : memref<16x128xf32, #tpu.memory_space<vmem>>, vector<16x128xf32>
      tpu.vector_store %arg9[%c0_11, %c0_12], %13 {strides = array<i32>} : memref<16x128xf32, #tpu.memory_space<vmem>>, vector<16x128xf32>,
    } else {
    }
    %c0 = arith.constant 0 : index
    %c0_1 = arith.constant 0 : index
    %3 = vector.load %arg9[%c0, %c0_1] : memref<16x128xf32, #tpu.memory_space<vmem>>, vector<16x128xf32>
    %c0_2 = arith.constant 0 : index
    %c0_3 = arith.constant 0 : index
    %4 = vector.load %arg2[%c0_2, %c0_3] : memref<16x32xf32, #tpu.memory_space<vmem>>, vector<16x32xf32>
    %5 = arith.truncf %4 : vector<16x32xf32> to vector<16x32xbf16>
    %c0_4 = arith.constant 0 : index
    %c0_5 = arith.constant 0 : index
    %6 = vector.load %arg3[%c0_4, %c0_5] : memref<32x128xbf16, #tpu.memory_space<vmem>>, vector<32x128xbf16>
    %cst = arith.constant dense<0.000000e+00> : vector<16x128xf32>
    %7 = tpu.matmul %5, %6, %cst {dimension_numbers = #tpu.dot_dimension_numbers<[1], [0], [0], [1], [0, 0, 1, 1], [], []>} : vector<16x32xbf16>, vector<32x128xbf16>, vector<16x128xf32> -> vector<16x128xf32>
    %8 = arith.addf %3, %7 : vector<16x128xf32>
    %c0_6 = arith.constant 0 : index
    %c0_7 = arith.constant 0 : index
    %9 = vector.load %arg9[%c0_6, %c0_7] : memref<16x128xf32, #tpu.memory_space<vmem>>, vector<16x128xf32>
    tpu.vector_store %arg9[%c0_6, %c0_7], %8 {strides = array<i32>} : memref<16x128xf32, #tpu.memory_space<vmem>>, vector<16x128xf32>,
    %c0_i32_8 = arith.constant 0 : i32
    %10 = arith.cmpi eq, %arg1, %c0_i32_8 : i32
    %11 = arith.extui %10 : i1 to i32
    %c0_i32_9 = arith.constant 0 : i32
    %12 = arith.cmpi ne, %11, %c0_i32_9 : i32
    scf.if %12 {
      %c0_10 = arith.constant 0 : index
      %c0_11 = arith.constant 0 : index
      %13 = vector.load %arg9[%c0_10, %c0_11] : memref<16x128xf32, #tpu.memory_space<vmem>>, vector<16x128xf32>
      %c0_12 = arith.constant 0 : index
      %c0_13 = arith.constant 0 : index
      %14 = vector.load %arg4[%c0_12, %c0_13] : memref<1x128xf32, #tpu.memory_space<vmem>>, vector<1x128xf32>
      %15 = vector.broadcast %14 : vector<1x128xf32> to vector<16x128xf32>
      %16 = arith.addf %13, %15 : vector<16x128xf32>
      %cst_14 = arith.constant 0.000000e+00 : f32
      %17 = vector.broadcast %cst_14 : f32 to vector<16x128xf32>
      %18 = arith.maximumf %16, %17 : vector<16x128xf32>
      %19 = arith.truncf %18 : vector<16x128xf32> to vector<16x128xbf16>
      %c0_15 = arith.constant 0 : index
      %c0_16 = arith.constant 0 : index
      %20 = vector.load %arg5[%c0_15, %c0_16] : memref<128x16xbf16, #tpu.memory_space<vmem>>, vector<128x16xbf16>
      %cst_17 = arith.constant dense<0.000000e+00> : vector<16x16xf32>
      %21 = tpu.matmul %19, %20, %cst_17 {dimension_numbers = #tpu.dot_dimension_numbers<[1], [0], [0], [1], [0, 0, 1, 1], [], []>} : vector<16x128xbf16>, vector<128x16xbf16>, vector<16x16xf32> -> vector<16x16xf32>
      %c0_18 = arith.constant 0 : index
      %c0_19 = arith.constant 0 : index
      %22 = vector.load %arg6[%c0_18, %c0_19] : memref<1x16xf32, #tpu.memory_space<vmem>>, vector<1x16xf32>
      %23 = vector.broadcast %22 : vector<1x16xf32> to vector<16x16xf32>
      %24 = arith.addf %21, %23 : vector<16x16xf32>
      %c0_20 = arith.constant 0 : index
      %c0_21 = arith.constant 0 : index
      %25 = vector.load %arg7[%c0_20, %c0_21] : memref<16x16xf32, #tpu.memory_space<vmem>>, vector<16x16xf32>
      tpu.vector_store %arg7[%c0_20, %c0_21], %24 {strides = array<i32>} : memref<16x16xf32, #tpu.memory_space<vmem>>, vector<16x16xf32>,
      %cst_22 = arith.constant 0.000000e+00 : f32
      %26 = vector.broadcast %cst_22 : f32 to vector<16x16xf32>
      %27 = arith.maximumf %24, %26 : vector<16x16xf32>
      %c0_23 = arith.constant 0 : index
      %c0_24 = arith.constant 0 : index
      %28 = vector.load %arg8[%c0_23, %c0_24] : memref<16x16xf32, #tpu.memory_space<vmem>>, vector<16x16xf32>
      tpu.vector_store %arg8[%c0_23, %c0_24], %27 {strides = array<i32>} : memref<16x16xf32, #tpu.memory_space<vmem>>, vector<16x16xf32>,
    } else {
    }
    return
  }
  func.func @transform_0(%arg0: i32, %arg1: i32) -> (i32, i32) {
    %c0_i32 = arith.constant 0 : i32
    return %arg0, %arg1 : i32, i32
  }
  func.func @transform_1(%arg0: i32, %arg1: i32) -> (i32, i32) {
    %c0_i32 = arith.constant 0 : i32
    %c0_i32_0 = arith.constant 0 : i32
    return %arg1, %c0_i32 : i32, i32
  }
  func.func @transform_2(%arg0: i32, %arg1: i32) -> (i32, i32) {
    %c0_i32 = arith.constant 0 : i32
    %c0_i32_0 = arith.constant 0 : i32
    %c0_i32_1 = arith.constant 0 : i32
    return %c0_i32, %c0_i32_0 : i32, i32
  }
  func.func @transform_3(%arg0: i32, %arg1: i32) -> (i32, i32) {
    %c0_i32 = arith.constant 0 : i32
    %c0_i32_0 = arith.constant 0 : i32
    %c0_i32_1 = arith.constant 0 : i32
    return %c0_i32, %c0_i32_0 : i32, i32
  }
  func.func @transform_4(%arg0: i32, %arg1: i32) -> (i32, i32) {
    %c0_i32 = arith.constant 0 : i32
    %c0_i32_0 = arith.constant 0 : i32
    %c0_i32_1 = arith.constant 0 : i32
    return %c0_i32, %c0_i32_0 : i32, i32
  }
  func.func @transform_5(%arg0: i32, %arg1: i32) -> (i32, i32) {
    %c0_i32 = arith.constant 0 : i32
    %c0_i32_0 = arith.constant 0 : i32
    return %arg0, %c0_i32 : i32, i32
  }
  func.func @transform_6(%arg0: i32, %arg1: i32) -> (i32, i32) {
    %c0_i32 = arith.constant 0 : i32
    %c0_i32_0 = arith.constant 0 : i32
    return %arg0, %c0_i32 : i32, i32
  }
}

</mosaic_0001>

<llo_original>
// kernel: tpu_custom_call.1
$region0: #{tpu_custom_call.1}
  #allocation0 [shape = 'u32[]', space=smem, size = 0x4, offset = 0x4, fixed_abs, tag = 'smem constant byte address 0x4 - core index']
  #allocation1 [shape = 'u32[144,128]{1,0:T(1,128)}', space=vmem, size = 0x12000, scoped, tag = 'internal scratch']
  #allocation2 [shape = 'f32[16,128]{1,0:T(8,128)}', space=vmem, size = 0x2000, scoped, tag = 'scratch operand']
  %s0 = inlined_call_operand.hbm [shape: f32[16,32], index: 0, kind: input, shape index: {}]
  %s1 = inlined_call_operand.hbm [shape: bf16[32,128], index: 1, kind: input, shape index: {}]
  %s2 = inlined_call_operand.hbm [shape: f32[1,128], index: 2, kind: input, shape index: {}]
  %s3 = inlined_call_operand.hbm [shape: bf16[128,16], index: 3, kind: input, shape index: {}]
  %s4 = inlined_call_operand.hbm [shape: f32[1,16], index: 4, kind: input, shape index: {}]
  %s5 = inlined_call_operand.hbm [shape: f32[16,16], index: 5, kind: output, shape index: {0}]
  %s6 = inlined_call_operand.hbm [shape: f32[16,16], index: 6, kind: output, shape index: {1}]
  %7 = xla_tuple %s5, %s6
  %s8 = sld [smem:[#allocation0]]
  $region66: #{tpu_custom_call.1} parent=0
    _
  %s10 = ssub.s32 1, %s8
  %s11 = scalar_select 0, %s10, %s8
  $region1: #{tpu_custom_call.1} parent=0
    #allocation3 [shape = 'u8[8192]{0}', space=vmem, size = 0x2000, scoped, tag = 'input window, operand 0, single buffered']
    #allocation4 [shape = 's32[1]{0}', space=sflag, size = 0x4, scoped, tag = 'scoped memory for tpu_custom_call.1']
    #allocation5 [shape = 's32[1]{0}', space=sflag, size = 0x4, scoped, tag = 'scoped memory for tpu_custom_call.1']
    #allocation6 [shape = 'u8[8192]{0}', space=vmem, size = 0x2000, scoped, tag = 'input window, operand 1, single buffered']
    #allocation7 [shape = 's32[1]{0}', space=sflag, size = 0x4, scoped, tag = 'scoped memory for tpu_custom_call.1']
    #allocation8 [shape = 'u8[512]{0}', space=vmem, size = 0x400, scoped, tag = 'input window, operand 2, single buffered']
    #allocation9 [shape = 'u8[32768]{0}', space=vmem, size = 0x8000, scoped, tag = 'input window, operand 3, single buffered']
    #allocation10 [shape = 's32[1]{0}', space=sflag, size = 0x4, scoped, tag = 'scoped memory for tpu_custom_call.1']
    #allocation11 [shape = 'u8[512]{0}', space=vmem, size = 0x400, scoped, tag = 'input window, operand 4, single buffered']
    #allocation12 [shape = 'u8[8192]{0}', space=vmem, size = 0x2000, scoped, tag = 'output window, operand 0, single buffered']
    #allocation13 [shape = 'u8[8192]{0}', space=vmem, size = 0x2000, scoped, tag = 'output window, operand 1, single buffered']
    #allocation14 [shape = 's32[1]{0}', space=sflag, size = 0x4, scoped, tag = 'scoped memory for tpu_custom_call.1']
    %12 = vsyncpa [#allocation4], 0
    %13 = vsyncpa [#allocation7], 0
    %14 = vsyncpa [#allocation10], 0
    %15 = vsyncpa [#allocation5], 0
    %16 = vsyncpa [#allocation14], 0
    // Predicated region
    $region2: #{tpu_custom_call.1} parent=1 // pred_check
      _
    $region3: #{tpu_custom_call.1} parent=1 // pred_check_branch
      %18 = sbr.rel (0) target = $region5
    $region4: #{tpu_custom_call.1} parent=1 // pred_region
      %s20 = ssub.s32 256, 256
      %21 = vsyncadd [#allocation4], %s20
      %s22 = sshll.u32 [#allocation3], 4
      %s23 = int_to_ptr.vmem [resolvable:$true] %s22
      %28 = dma.hbm_to_vmem [thread:$0]  %s0, 256, %s23, [#allocation4], 128, 128, 8
    $region5: #{tpu_custom_call.1} parent=1 // pred_fallthru
      _
    // Predicated region
    $region6: #{tpu_custom_call.1} parent=1 // pred_check
      _
    $region7: #{tpu_custom_call.1} parent=1 // pred_check_branch
      %30 = sbr.rel (0) target = $region9
    $region8: #{tpu_custom_call.1} parent=1 // pred_region
      %s32 = ssub.s32 256, 256
      %33 = vsyncadd [#allocation7], %s32
      %s34 = sshll.u32 [#allocation6], 4
      %s35 = int_to_ptr.vmem [resolvable:$true] %s34
      %40 = dma.hbm_to_vmem [thread:$0]  %s1, 256, %s35, [#allocation7], 64, 64, 4
    $region9: #{tpu_custom_call.1} parent=1 // pred_fallthru
      _
    // Predicated region
    $region10: #{tpu_custom_call.1} parent=1 // pred_check
      _
    $region11: #{tpu_custom_call.1} parent=1 // pred_check_branch
      %42 = sbr.rel (0) target = $region13
    $region12: #{tpu_custom_call.1} parent=1 // pred_region
      %s44 = ssub.s32 16, 16
      %45 = vsyncadd [#allocation7], %s44
      %s47 = sshll.u32 [#allocation8], 4
      %s48 = int_to_ptr.vmem [resolvable:$true] %s47
      %50 = dma.hbm_to_vmem [thread:$0]  %s2, 16, %s48, [#allocation7]
    $region13: #{tpu_custom_call.1} parent=1 // pred_fallthru
      _
    // Predicated region
    $region14: #{tpu_custom_call.1} parent=1 // pred_check
      _
    $region15: #{tpu_custom_call.1} parent=1 // pred_check_branch
      %52 = sbr.rel (0) target = $region17
    $region16: #{tpu_custom_call.1} parent=1 // pred_region
      %s54 = ssub.s32 1024, 1024
      %55 = vsyncadd [#allocation10], %s54
      %s56 = sshll.u32 [#allocation9], 4
      %s57 = int_to_ptr.vmem [resolvable:$true] %s56
      %62 = dma.hbm_to_vmem [thread:$0]  %s3, 1024, %s57, [#allocation10], 64, 64, 4
    $region17: #{tpu_custom_call.1} parent=1 // pred_fallthru
      _
    // Predicated region
    $region18: #{tpu_custom_call.1} parent=1 // pred_check
      _
    $region19: #{tpu_custom_call.1} parent=1 // pred_check_branch
      %64 = sbr.rel (0) target = $region21
    $region20: #{tpu_custom_call.1} parent=1 // pred_region
      %s66 = ssub.s32 16, 16
      %67 = vsyncadd [#allocation10], %s66
      %s69 = sshll.u32 [#allocation11], 4
      %s70 = int_to_ptr.vmem [resolvable:$true] %s69
      %72 = dma.hbm_to_vmem [thread:$0]  %s4, 16, %s70, [#allocation10]
    $region21: #{tpu_custom_call.1} parent=1 // pred_fallthru
      _
    // Predicated region
    $region22: #{tpu_custom_call.1} parent=1 // pred_check
      _
    $region23: #{tpu_custom_call.1} parent=1 // pred_check_branch
      %74 = sbr.rel (0) target = $region25
    $region24: #{tpu_custom_call.1} parent=1 // pred_region
      %75 = dma.done [#allocation4], 256
    $region25: #{tpu_custom_call.1} parent=1 // pred_fallthru
      _
    // Predicated region
    $region26: #{tpu_custom_call.1} parent=1 // pred_check
      _
    $region27: #{tpu_custom_call.1} parent=1 // pred_check_branch
      %77 = sbr.rel (0) target = $region29
    $region28: #{tpu_custom_call.1} parent=1 // pred_region
      %78 = dma.done [#allocation7], 256
    $region29: #{tpu_custom_call.1} parent=1 // pred_fallthru
      _
    // Predicated region
    $region30: #{tpu_custom_call.1} parent=1 // pred_check
      _
    $region31: #{tpu_custom_call.1} parent=1 // pred_check_branch
      %80 = sbr.rel (0) target = $region33
    $region32: #{tpu_custom_call.1} parent=1 // pred_region
      %81 = dma.done [#allocation7], 16
    $region33: #{tpu_custom_call.1} parent=1 // pred_fallthru
      _
    // Predicated region
    $region34: #{tpu_custom_call.1} parent=1 // pred_check
      _
    $region35: #{tpu_custom_call.1} parent=1 // pred_check_branch
      %83 = sbr.rel (0) target = $region37
    $region36: #{tpu_custom_call.1} parent=1 // pred_region
      %84 = dma.done [#allocation10], 1024
    $region37: #{tpu_custom_call.1} parent=1 // pred_fallthru
      _
    // Predicated region
    $region38: #{tpu_custom_call.1} parent=1 // pred_check
      _
    $region39: #{tpu_custom_call.1} parent=1 // pred_check_branch
      %86 = sbr.rel (0) target = $region41
    $region40: #{tpu_custom_call.1} parent=1 // pred_region
      %87 = dma.done [#allocation10], 16
    $region41: #{tpu_custom_call.1} parent=1 // pred_fallthru
      _
    %p89 = scmp.eq.s32.totalorder 0, 0
    // Predicated region
    $region42: #{tpu_custom_call.1} parent=1 // pred_check
      %p90 = pneg %p89
    $region43: #{tpu_custom_call.1} parent=1 // pred_check_branch
      %92 = sbr.rel (%p90) target = $region45
    $region44: #{tpu_custom_call.1} parent=1 // pred_region
      %93 = vst [vmem:[#allocation2] sm:$0xff] 0.0
      %94 = vst [vmem:[#allocation2 + $0x8] sm:$0xff] 0.0
    $region45: #{tpu_custom_call.1} parent=1 // pred_fallthru
      _
    %v95 = vld [vmem:[#allocation2] sm:$0xff]
    %v96 = vld [vmem:[#allocation2 + $0x8] sm:$0xff]
    %v97 = vld [vmem:[#allocation3] sm:$0xff]
    %v98 = vld [vmem:[#allocation3 + $0x8] sm:$0xff]
    %v99 = vpack.c.bf16 %v98, %v97
    %v100 = vld [vmem:[#allocation6] sm:$0xf]
    %v101 = vld [vmem:[#allocation6 + $0x4] sm:$0xf]
    %v102 = vld [vmem:[#allocation6 + $0x8] sm:$0xf]
    %v103 = vld [vmem:[#allocation6 + $0xc] sm:$0xf]
    %v108 = vunpack.c.l.b16 %v100
    %v109 = vunpack.c.l.b16 %v101
    %v110 = vunpack.c.l.b16 %v102
    %v111 = vunpack.c.l.b16 %v103
    %v112 = vpack.c.b16 %v109, %v108
    %v113 = vpack.c.b16 %v111, %v110
    %vm116 = vcmask 261120
    %v118 = vsel %vm116, %v99, 0
    %120 = vmatprep.subr.bf16.mxu0 0
    %121 = vmatpush1.bf16.msra.mxu0 %v112
    %122 = vmatprep.subr.bf16.mxu0 0
    %123 = vmatpush1.bf16.msra.mxu0 %v113
    %124 = vmatprep.subr.bf16.mxu0 0
    %125 = vmatpush1.bf16.msra.mxu0 0
    %126 = vmatprep.subr.bf16.mxu0 0
    %127 = vmatpush1.bf16.msra.mxu0 0
    %128 = vmatprep.subr.bf16.mxu0 0
    %129 = vmatpush1.bf16.msra.mxu0 0
    %130 = vmatprep.subr.bf16.mxu0 0
    %131 = vmatpush1.bf16.msra.mxu0 0
    %132 = vmatprep.subr.bf16.mxu0 0
    %133 = vmatpush1.bf16.msra.mxu0 0
    %134 = vmatprep.subr.bf16.mxu0 0
    %135 = vmatpush1.bf16.msra.mxu0 0
    %136 = vmatprep.subr.bf16.mxu0 0
    %137 = vmatpush1.bf16.msra.mxu0 0
    %138 = vmatprep.subr.bf16.mxu0 0
    %139 = vmatpush1.bf16.msra.mxu0 0
    %140 = vmatprep.subr.bf16.mxu0 0
    %141 = vmatpush1.bf16.msra.mxu0 0
    %142 = vmatprep.subr.bf16.mxu0 0
    %143 = vmatpush1.bf16.msra.mxu0 0
    %144 = vmatprep.subr.bf16.mxu0 0
    %145 = vmatpush1.bf16.msra.mxu0 0
    %146 = vmatprep.subr.bf16.mxu0 0
    %147 = vmatpush1.bf16.msra.mxu0 0
    %148 = vmatprep.subr.bf16.mxu0 0
    %149 = vmatpush1.bf16.msra.mxu0 0
    %150 = vmatprep.subr.bf16.mxu0 0
    %151 = vmatpush1.bf16.msra.mxu0 0
    %152 = vmatprep.mubr.bf16.mxu0 0
    %153 = vmatmul.mubr.bf16.gmra.mrb[0].mxu0 %v118
    %v154 = vpop.f32.mrb[0].mxu0
    %v155 = vadd.f32 0.0, %v154
    %v156 = vpop.f32.mrb[0].mxu0
    %v157 = vpop.f32.mrb[0].mxu0
    %v158 = vadd.f32 0.0, %v157
    %v159 = vpop.f32.mrb[0].mxu0
    %160 = vdwg.mxu0
    %v161 = vadd.f32 %v95, %v155
    %v162 = vadd.f32 %v96, %v158
    %163 = vst [vmem:[#allocation2] sm:$0xff] %v161
    %164 = vst [vmem:[#allocation2 + $0x8] sm:$0xff] %v162
    // Predicated region
    $region46: #{tpu_custom_call.1} parent=1 // pred_check
      %p165 = pneg %p89
    $region47: #{tpu_custom_call.1} parent=1 // pred_check_branch
      %167 = sbr.rel (%p165) target = $region49
    $region48: #{tpu_custom_call.1} parent=1 // pred_region
      %v168 = vld [vmem:[#allocation2] sm:$0xff]
      %v169 = vld [vmem:[#allocation2 + $0x8] sm:$0xff]
      %v170 = vld [vmem:[#allocation8] sm:$0x1]
      %v172 = vlaneseq
      %v173 = vshrl.u32 %v172, 7
      %v174 = vsub.s32 0, %v173
      %v175 = vrot.slane %v170, %v174
      %v177 = vadd.f32 %v168, %v175
      %v178 = vadd.f32 %v169, %v175
      %v179 = vmax.f32 %v177, 0.0
      %v180 = vmax.f32 %v178, 0.0
      %v181 = vpack.c.bf16 %v180, %v179
      %v182 = vld [vmem:[#allocation9] sm:$0xf]
      %v183 = vld [vmem:[#allocation9 + $0x4] sm:$0xf]
      %v184 = vld [vmem:[#allocation9 + $0x8] sm:$0xf]
      %v185 = vld [vmem:[#allocation9 + $0xc] sm:$0xf]
      %v186 = vld [vmem:[#allocation9 + $0x10] sm:$0xf]
      %v187 = vld [vmem:[#allocation9 + $0x14] sm:$0xf]
      %v188 = vld [vmem:[#allocation9 + $0x18] sm:$0xf]
      %v189 = vld [vmem:[#allocation9 + $0x1c] sm:$0xf]
      %v190 = vld [vmem:[#allocation9 + $0x20] sm:$0xf]
      %v191 = vld [vmem:[#allocation9 + $0x24] sm:$0xf]
      %v192 = vld [vmem:[#allocation9 + $0x28] sm:$0xf]
      %v193 = vld [vmem:[#allocation9 + $0x2c] sm:$0xf]
      %v194 = vld [vmem:[#allocation9 + $0x30] sm:$0xf]
      %v195 = vld [vmem:[#allocation9 + $0x34] sm:$0xf]
      %v196 = vld [vmem:[#allocation9 + $0x38] sm:$0xf]
      %v197 = vld [vmem:[#allocation9 + $0x3c] sm:$0xf]
      %v198 = vld [vmem:[#allocation11] sm:$0x1]
      %v200 = vlaneseq
      %v201 = vshrl.u32 %v200, 7
      %v202 = vsub.s32 0, %v201
      %v203 = vrot.slane %v198, %v202
      %v221 = vunpack.c.l.b16 %v182
      %v222 = vunpack.c.l.b16 %v183
      %v223 = vunpack.c.l.b16 %v184
      %v224 = vunpack.c.l.b16 %v185
      %v225 = vunpack.c.l.b16 %v186
      %v226 = vunpack.c.l.b16 %v187
      %v227 = vunpack.c.l.b16 %v188
      %v228 = vunpack.c.l.b16 %v189
      %v229 = vunpack.c.l.b16 %v190
      %v230 = vunpack.c.l.b16 %v191
      %v231 = vunpack.c.l.b16 %v192
      %v232 = vunpack.c.l.b16 %v193
      %v233 = vunpack.c.l.b16 %v194
      %v234 = vunpack.c.l.b16 %v195
      %v235 = vunpack.c.l.b16 %v196
      %v236 = vunpack.c.l.b16 %v197
      %v237 = vpack.c.b16 %v222, %v221
      %v238 = vpack.c.b16 %v224, %v223
      %v239 = vpack.c.b16 %v226, %v225
      %v240 = vpack.c.b16 %v228, %v227
      %v241 = vpack.c.b16 %v230, %v229
      %v242 = vpack.c.b16 %v232, %v231
      %v243 = vpack.c.b16 %v234, %v233
      %v244 = vpack.c.b16 %v236, %v235
      %253 = vmatprep.subr.bf16.mxu0 0
      %254 = vmatpush1.bf16.msra.mxu0 %v237
      %255 = vmatprep.subr.bf16.mxu0 0
      %256 = vmatpush1.bf16.msra.mxu0 %v238
      %257 = vmatprep.subr.bf16.mxu0 0
      %258 = vmatpush1.bf16.msra.mxu0 %v239
      %259 = vmatprep.subr.bf16.mxu0 0
      %260 = vmatpush1.bf16.msra.mxu0 %v240
      %261 = vmatprep.subr.bf16.mxu0 0
      %262 = vmatpush1.bf16.msra.mxu0 %v241
      %263 = vmatprep.subr.bf16.mxu0 0
      %264 = vmatpush1.bf16.msra.mxu0 %v242
      %265 = vmatprep.subr.bf16.mxu0 0
      %266 = vmatpush1.bf16.msra.mxu0 %v243
      %267 = vmatprep.subr.bf16.mxu0 0
      %268 = vmatpush1.bf16.msra.mxu0 %v244
      %269 = vmatprep.subr.bf16.mxu0 0
      %270 = vmatpush1.bf16.msra.mxu0 0
      %271 = vmatprep.subr.bf16.mxu0 0
      %272 = vmatpush1.bf16.msra.mxu0 0
      %273 = vmatprep.subr.bf16.mxu0 0
      %274 = vmatpush1.bf16.msra.mxu0 0
      %275 = vmatprep.subr.bf16.mxu0 0
      %276 = vmatpush1.bf16.msra.mxu0 0
      %277 = vmatprep.subr.bf16.mxu0 0
      %278 = vmatpush1.bf16.msra.mxu0 0
      %279 = vmatprep.subr.bf16.mxu0 0
      %280 = vmatpush1.bf16.msra.mxu0 0
      %281 = vmatprep.subr.bf16.mxu0 0
      %282 = vmatpush1.bf16.msra.mxu0 0
      %283 = vmatprep.subr.bf16.mxu0 0
      %284 = vmatpush1.bf16.msra.mxu0 0
      %285 = vmatprep.mubr.bf16.mxu0 0
      %286 = vmatmul.mubr.bf16.gmra.mrb[0].mxu0 %v181
      %v287 = vpop.f32.mrb[0].mxu0
      %v288 = vadd.f32 %v203, %v287
      %v289 = vpop.f32.mrb[0].mxu0
      %v290 = vpop.f32.mrb[0].mxu0
      %v291 = vadd.f32 %v203, %v290
      %v292 = vpop.f32.mrb[0].mxu0
      %293 = vdwg.mxu0
      %vm294 = vcmask 130048
      %295 = vst.msk [vmem:[#allocation12] sm:$0xff] %vm294, %v288
      %296 = vst.msk [vmem:[#allocation12 + $0x8] sm:$0xff] %vm294, %v291
      %v297 = vmax.f32 %v288, 0.0
      %v298 = vmax.f32 %v291, 0.0
      %299 = vst.msk [vmem:[#allocation13] sm:$0xff] %vm294, %v297
      %300 = vst.msk [vmem:[#allocation13 + $0x8] sm:$0xff] %vm294, %v298
    $region49: #{tpu_custom_call.1} parent=1 // pred_fallthru
      _
    // Predicated region
    $region50: #{tpu_custom_call.1} parent=1 // pred_check
      _
    $region51: #{tpu_custom_call.1} parent=1 // pred_check_branch
      %302 = sbr.rel (0) target = $region53
    $region52: #{tpu_custom_call.1} parent=1 // pred_region
      %s304 = ssub.s32 256, 256
      %305 = vsyncadd [#allocation5], %s304
      %s306 = sshll.u32 [#allocation12], 4
      %s307 = int_to_ptr.vmem [resolvable:$true] %s306
      %312 = dma.vmem_to_hbm [thread:$0]  %s307, 256, %s5, [#allocation5], 128, 128, 8
    $region53: #{tpu_custom_call.1} parent=1 // pred_fallthru
      _
    // Predicated region
    $region54: #{tpu_custom_call.1} parent=1 // pred_check
      _
    $region55: #{tpu_custom_call.1} parent=1 // pred_check_branch
      %314 = sbr.rel (0) target = $region57
    $region56: #{tpu_custom_call.1} parent=1 // pred_region
      %s316 = ssub.s32 256, 256
      %317 = vsyncadd [#allocation14], %s316
      %s318 = sshll.u32 [#allocation13], 4
      %s319 = int_to_ptr.vmem [resolvable:$true] %s318
      %324 = dma.vmem_to_hbm [thread:$0]  %s319, 256, %s6, [#allocation14], 128, 128, 8
    $region57: #{tpu_custom_call.1} parent=1 // pred_fallthru
      _
    // Predicated region
    $region58: #{tpu_custom_call.1} parent=1 // pred_check
      _
    $region59: #{tpu_custom_call.1} parent=1 // pred_check_branch
      %326 = sbr.rel (0) target = $region61
    $region60: #{tpu_custom_call.1} parent=1 // pred_region
      %327 = dma.done [#allocation5], 256
    $region61: #{tpu_custom_call.1} parent=1 // pred_fallthru
      _
    // Predicated region
    $region62: #{tpu_custom_call.1} parent=1 // pred_check
      _
    $region63: #{tpu_custom_call.1} parent=1 // pred_check_branch
      %329 = sbr.rel (0) target = $region65
    $region64: #{tpu_custom_call.1} parent=1 // pred_region
      %330 = dma.done [#allocation14], 256
    $region65: #{tpu_custom_call.1} parent=1 // pred_fallthru
      _
    %331 = vsyncpa [#allocation4], 1
    %332 = vsyncpa [#allocation7], 1
    %333 = vsyncpa [#allocation10], 1
    %334 = vsyncpa [#allocation5], 1
    %335 = vsyncpa [#allocation14], 1

</llo_original>
